<compile_context>
chip_gen: v7x
topology: tpu7x:2x2x1
jax: 0.10.0
libtpu: 0.0.40
codegen_flags: <defaults>
</compile_context>

<pallas_src>
import functools

import jax
import jax.numpy as jnp
from jax.experimental import pallas as pl
from jax.experimental.pallas import tpu as pltpu


# Budget for in-kernel tile-sized temporaries; sized for v7x (64 MiB physical
# VMEM) and comfortably inside v5e/v6e's 128 MiB.
_TEMP_VMEM_BUDGET = 24 << 20
_VMEM_LIMIT_CAP = 48 << 20


def _round_up(x, m):
    return (x + m - 1) // m * m


def _cdiv(a, b):
    return -(-a // b)


def _sort2(a, b):
    return jnp.minimum(a, b), jnp.maximum(a, b)


def _median_generic(v):
    """Lower median (torch.median semantics) via partial bubble selection.

    Pushes only the top (n-1-m) values out of the running set, then takes the
    max of the remaining bottom m+1 values.  Values parked above position m are
    never read again, so JAX DCE drops those dead max's.
    """
    v = list(v)
    n = len(v)
    m = (n - 1) // 2
    for top in range(n - 1, m, -1):
        for j in range(top):
            v[j], v[j + 1] = _sort2(v[j], v[j + 1])
    med = v[0]
    for j in range(1, m + 1):
        med = jnp.maximum(med, v[j])
    return med


def _median_filter_kernel(above_ref, main_ref, below_ref, o_ref, slab_ref, *,
                          k, tile_h, hv, h_img, w_img, w_lanes, mask_main,
                          compute_dtype):
    """above/below: (1, hv, W) halo rows, main: (1, tile_h, W), o: (1, tile_h, W).

    slab_ref: (tile_h + 2*hv, w_lanes) VMEM scratch holding image rows
    [row0 - hv, row0 + tile_h + hv) zero-extended (rows outside the image and
    lanes >= W are zero), so rolls wrap into unfold's zero border."""
    p = (k - 1) // 2
    row0 = pl.program_id(1) * tile_h           # global row of the tile's first output row

    def valid_rows(vals, start_row):
        # Zero rows that fall outside the image (unfold zero border / OOB reads).
        g = start_row + jax.lax.broadcasted_iota(jnp.int32, vals.shape, 0)
        return jnp.where((g >= 0) & (g < h_img), vals, 0)

    # ---- assemble the zero-extended slab -----------------------------------
    slab_ref[:, w_img:] = jnp.zeros((tile_h + 2 * hv, w_lanes - w_img),
                                    compute_dtype)
    slab_ref[0:hv, 0:w_img] = valid_rows(
        above_ref[0].astype(compute_dtype), row0 - hv)
    main = main_ref[0].astype(compute_dtype)
    if mask_main:           # only needed when the last tile overhangs the image
        main = valid_rows(main, row0)
    slab_ref[hv:hv + tile_h, 0:w_img] = main
    slab_ref[hv + tile_h:hv + tile_h + hv, 0:w_img] = valid_rows(
        below_ref[0].astype(compute_dtype), row0 + tile_h)

    def row_plane(dy):
        # Image rows (r - p + dy) for every output row r of the tile.
        s = hv - p + dy
        return slab_ref[s:s + tile_h, :]

    def nbr(plane, ddx):
        # Horizontal neighbour at column offset ddx via an XLU lane rotation.
        # The wrap region is zero padding, so edge pixels see unfold's border.
        return pltpu.roll(plane, shift=(-ddx) % w_lanes, axis=1)

    def med3(a, b, c):
        return jnp.maximum(jnp.minimum(a, b),
                           jnp.minimum(jnp.maximum(a, b), c))

    if k == 3:
        # Sorted-column median of 9: sort each vertical triple once (shared by
        # the 3 horizontally adjacent windows), then
        #   median9 = med3(max3(lows), med3(mids), min3(highs)).
        r0, r1, r2 = row_plane(0), row_plane(1), row_plane(2)
        lo, mi = _sort2(r0, r1)
        mi, hi = _sort2(mi, r2)
        lo, mi = _sort2(lo, mi)
        maxlo = jnp.maximum(jnp.maximum(nbr(lo, -1), lo), nbr(lo, 1))
        minhi = jnp.minimum(jnp.minimum(nbr(hi, -1), hi), nbr(hi, 1))
        medmi = med3(nbr(mi, -1), mi, nbr(mi, 1))
        med = med3(maxlo, medmi, minhi)
    else:
        taps = []
        for dy in range(k):
            row = row_plane(dy)
            for ddx in range(-p, p + 1):
                taps.append(row if ddx == 0 else nbr(row, ddx))
        med = _median_generic(taps)

    o_ref[0] = med[:, :w_img].astype(o_ref.dtype)


def _prefers_f32_compute(dtype):
    """v5e has no bf16 VPU path -> upcast inside the kernel there only."""
    if dtype != jnp.bfloat16:
        return False
    try:
        kind = jax.devices()[0].device_kind.lower()
    except Exception:
        return False
    return ("v5 lite" in kind) or ("v5e" in kind) or ("v5litepod" in kind)


def median_filter(x, kernel_size=1):
    """Pallas equivalent of MedianFilter(kernel_size).forward(x); x: (N, 1, H, W)."""
    N, C, H, W = x.shape
    if C != 1:
        raise ValueError("view_as(x) in the torch module only type-checks for C == 1")
    k = int(kernel_size)
    if k % 2 != 1:
        raise ValueError("kernel_size must be odd (torch view_as only lines up for odd k)")
    if k == 1:
        return x                      # 1x1 median is the identity: zero HBM traffic.

    p = (k - 1) // 2
    dtype = x.dtype
    compute_dtype = jnp.float32 if _prefers_f32_compute(dtype) else dtype
    itemsize = jnp.dtype(dtype).itemsize
    c_item = jnp.dtype(compute_dtype).itemsize

    # Sublane packing of the narrowest dtype involved (f32:8, bf16:16, int8:32);
    # all row-block sizes are multiples of this so DMA'd blocks stay tile-aligned.
    pack = 8 * max(1, 4 // min(itemsize, c_item))
    hv = _round_up(p, pack)                    # vertical halo rows (>= p)
    w_lanes = _round_up(W + p, 128)            # lane-dense slab width + zero wrap region

    x3 = x.reshape(N, H, W)                    # free squeeze of the channel dim
    h_arr = H
    if H < hv:
        # Tiny image: bottom-pad to one packed block so no BlockSpec outgrows the
        # array; the in-kernel row mask keeps the unfold zero-border semantics.
        h_arr = hv
        x3 = jnp.pad(x3, ((0, 0), (0, hv - H), (0, 0)))

    # VMEM-budgeted tile height (multiple of hv).  `live` ~= concurrently live
    # tile-sized planes inside the kernel (small for the k==3 sorted-column
    # path, ~k^2 for the generic selection).
    live = 12 if k == 3 else (k * k + k + 8)
    row_bytes = w_lanes * c_item
    tile_budget = max(hv, (_TEMP_VMEM_BUDGET // (live * row_bytes)) // hv * hv)
    tile_cap = max(hv, (h_arr // hv) * hv)     # keep blocks no taller than the image
    tile_h = min(tile_budget, tile_cap)
    if N == 1:
        # v7x megacore: a single-image call should still give >= 2 parallel cells.
        half = _round_up(_cdiv(h_arr, 2), hv)
        if half < tile_h:
            tile_h = half
    n_tiles = _cdiv(h_arr, tile_h)
    rt = tile_h // hv                           # halo blocks per main tile
    last_hblk = _cdiv(h_arr, hv) - 1            # clamp target for the below halo

    kernel = functools.partial(
        _median_filter_kernel, k=k, tile_h=tile_h, hv=hv, h_img=H, w_img=W,
        w_lanes=w_lanes, mask_main=(h_arr % tile_h != 0),
        compute_dtype=compute_dtype)

    # Explicit scoped-VMEM limit: double-buffered in/out blocks + slab + temps.
    wl_in = _round_up(W, 128)
    est = (2 * (2 * tile_h + 2 * hv) * wl_in * itemsize
           + (tile_h + 2 * hv) * w_lanes * c_item
           + live * tile_h * w_lanes * c_item)
    vmem_limit = int(min(_VMEM_LIMIT_CAP, max(32 << 20, int(est * 1.5))))

    out = pl.pallas_call(
        kernel,
        out_shape=jax.ShapeDtypeStruct((N, h_arr, W), dtype),
        grid=(N, n_tiles),
        in_specs=[
            # Halo rows just above the tile (clamped; masked to zero for tile 0).
            pl.BlockSpec((1, hv, W),
                         lambda n, i: (n, jnp.maximum(i * rt - 1, 0), 0)),
            # Main rows of the tile.
            pl.BlockSpec((1, tile_h, W), lambda n, i: (n, i, 0)),
            # Halo rows just below the tile (clamped; masked to zero past the image).
            pl.BlockSpec((1, hv, W),
                         lambda n, i: (n, jnp.minimum((i + 1) * rt, last_hblk), 0)),
        ],
        out_specs=pl.BlockSpec((1, tile_h, W), lambda n, i: (n, i, 0)),
        scratch_shapes=[pltpu.VMEM((tile_h + 2 * hv, w_lanes), compute_dtype)],
        compiler_params=pltpu.CompilerParams(
            dimension_semantics=("parallel", "parallel"),
            vmem_limit_bytes=vmem_limit),
    )(x3, x3, x3)       # same array three times: tile + its two halo views

    if h_arr != H:
        out = out[:, :H]
    return out.reshape(N, C, H, W)


def _reference_median_filter(x, kernel_size=1):
    """Pure-JAX reference mirroring the torch unfold + median path."""
    N, C, H, W = x.shape
    k = kernel_size
    p = (k - 1) // 2
    xp = jnp.pad(x, ((0, 0), (0, 0), (p, p), (p, p)))
    patches = jnp.stack(
        [xp[:, :, dy:dy + H, dx:dx + W] for dy in range(k) for dx in range(k)],
        axis=1,
    )  # (N, k*k, C, H, W)
    patches = patches.reshape(N, k * k * C, H * W)
    med = jnp.sort(patches, axis=1)[:, (k * k * C - 1) // 2]  # lower median
    return med.reshape(x.shape)


if __name__ == "__main__":
    key = jax.random.PRNGKey(0)
    k1, k2, k3 = jax.random.split(key, 3)

    # Small shape consistent with the module's requirements (C must be 1).
    x = jax.random.normal(k1, (2, 1, 16, 16), dtype=jnp.float32)
    for ksize in (1, 3, 5):
        y = jax.block_until_ready(median_filter(x, kernel_size=ksize))
        y_ref = _reference_median_filter(x, kernel_size=ksize)
        assert y.shape == x.shape and y.dtype == x.dtype
        assert jnp.allclose(y, y_ref, atol=1e-6, rtol=1e-6), f"mismatch for k={ksize}"

    # Multi-tile / partial-last-tile / single-batch (megacore split) path.
    xb = jax.random.normal(k2, (1, 1, 40, 24), dtype=jnp.float32)
    yb = jax.block_until_ready(median_filter(xb, kernel_size=3))
    yb_ref = _reference_median_filter(xb, kernel_size=3)
    assert jnp.allclose(yb, yb_ref, atol=1e-6, rtol=1e-6), "mismatch for tiled case"

    # bf16 path (16-row sublane packing; f32 compute on v5e only).
    xc = jax.random.normal(k3, (2, 1, 16, 16), dtype=jnp.bfloat16)
    yc = jax.block_until_ready(median_filter(xc, kernel_size=3))
    yc_ref = _reference_median_filter(xc, kernel_size=3)
    assert yc.dtype == jnp.bfloat16
    assert jnp.allclose(yc.astype(jnp.float32), yc_ref.astype(jnp.float32)), "bf16 mismatch"

    print("KERNEL_OK")
</pallas_src>

<mosaic_0001>
module attributes {stable_mosaic.version = 11 : i64} {
  func.func @_median_filter_kernel(%arg0: i32, %arg1: i32, %arg2: memref<1x8x16xf32, #tpu.memory_space<vmem>>, %arg3: memref<1x16x16xf32, #tpu.memory_space<vmem>>, %arg4: memref<1x8x16xf32, #tpu.memory_space<vmem>>, %arg5: memref<1x16x16xf32, #tpu.memory_space<vmem>>, %arg6: memref<32x128xf32, #tpu.memory_space<vmem>>) attributes {dimension_semantics = [#tpu.dimension_semantics<parallel>, #tpu.dimension_semantics<parallel>], iteration_bounds = array<i64: 2, 1>, scalar_prefetch = 0 : i64, scratch_operands = 1 : i64, tpu.core_type = #tpu.core_type<tc>, window_params = [{transform_indices = @transform_0, window_bounds = array<i64: 1, 8, 16>}, {transform_indices = @transform_1, window_bounds = array<i64: 1, 16, 16>}, {transform_indices = @transform_2, window_bounds = array<i64: 1, 8, 16>}, {transform_indices = @transform_3, window_bounds = array<i64: 1, 16, 16>}]} {
    %c16_i32 = arith.constant 16 : i32
    %0 = arith.muli %arg1, %c16_i32 : i32
    %cst = arith.constant 0.000000e+00 : f32
    %1 = vector.broadcast %cst : f32 to vector<32x112xf32>
    %c0 = arith.constant 0 : index
    %c16 = arith.constant 16 : index
    %2 = vector.load %arg6[%c0, %c16] : memref<32x128xf32, #tpu.memory_space<vmem>>, vector<32x112xf32>
    tpu.vector_store %arg6[%c0, %c16], %1 {strides = array<i32>} : memref<32x128xf32, #tpu.memory_space<vmem>>, vector<32x112xf32>,
    %c0_0 = arith.constant 0 : index
    %c0_1 = arith.constant 0 : index
    %c0_2 = arith.constant 0 : index
    %3 = vector.load %arg2[%c0_0, %c0_1, %c0_2] : memref<1x8x16xf32, #tpu.memory_space<vmem>>, vector<1x8x16xf32>
    %4 = vector.shape_cast %3 : vector<1x8x16xf32> to vector<8x16xf32>
    %c8_i32 = arith.constant 8 : i32
    %5 = arith.subi %0, %c8_i32 : i32
    %6 = tpu.iota {dimensions = array<i32: 0>} : vector<8x16xi32>
    %7 = vector.broadcast %5 : i32 to vector<8x16xi32>
    %8 = arith.addi %7, %6 : vector<8x16xi32>
    %c0_i32 = arith.constant 0 : i32
    %9 = vector.broadcast %c0_i32 : i32 to vector<8x16xi32>
    %10 = arith.cmpi sge, %8, %9 : vector<8x16xi32>
    %c16_i32_3 = arith.constant 16 : i32
    %11 = vector.broadcast %c16_i32_3 : i32 to vector<8x16xi32>
    %12 = arith.cmpi slt, %8, %11 : vector<8x16xi32>
    %13 = arith.andi %10, %12 : vector<8x16xi1>
    %c0_i32_4 = arith.constant 0 : i32
    %14 = arith.sitofp %c0_i32_4 : i32 to f32
    %15 = vector.broadcast %14 : f32 to vector<8x16xf32>
    %16 = arith.select %13, %4, %15 : vector<8x16xi1>, vector<8x16xf32>
    %c0_5 = arith.constant 0 : index
    %c0_6 = arith.constant 0 : index
    %17 = vector.load %arg6[%c0_5, %c0_6] : memref<32x128xf32, #tpu.memory_space<vmem>>, vector<8x16xf32>
    tpu.vector_store %arg6[%c0_5, %c0_6], %16 {strides = array<i32>} : memref<32x128xf32, #tpu.memory_space<vmem>>, vector<8x16xf32>,
    %c0_7 = arith.constant 0 : index
    %c0_8 = arith.constant 0 : index
    %c0_9 = arith.constant 0 : index
    %18 = vector.load %arg3[%c0_7, %c0_8, %c0_9] : memref<1x16x16xf32, #tpu.memory_space<vmem>>, vector<1x16x16xf32>
    %19 = vector.shape_cast %18 : vector<1x16x16xf32> to vector<16x16xf32>
    %c8 = arith.constant 8 : index
    %c0_10 = arith.constant 0 : index
    %20 = vector.load %arg6[%c8, %c0_10] : memref<32x128xf32, #tpu.memory_space<vmem>>, vector<16x16xf32>
    tpu.vector_store %arg6[%c8, %c0_10], %19 {strides = array<i32>} : memref<32x128xf32, #tpu.memory_space<vmem>>, vector<16x16xf32>,
    %c0_11 = arith.constant 0 : index
    %c0_12 = arith.constant 0 : index
    %c0_13 = arith.constant 0 : index
    %21 = vector.load %arg4[%c0_11, %c0_12, %c0_13] : memref<1x8x16xf32, #tpu.memory_space<vmem>>, vector<1x8x16xf32>
    %22 = vector.shape_cast %21 : vector<1x8x16xf32> to vector<8x16xf32>
    %c16_i32_14 = arith.constant 16 : i32
    %23 = arith.addi %0, %c16_i32_14 : i32
    %24 = tpu.iota {dimensions = array<i32: 0>} : vector<8x16xi32>
    %25 = vector.broadcast %23 : i32 to vector<8x16xi32>
    %26 = arith.addi %25, %24 : vector<8x16xi32>
    %c0_i32_15 = arith.constant 0 : i32
    %27 = vector.broadcast %c0_i32_15 : i32 to vector<8x16xi32>
    %28 = arith.cmpi sge, %26, %27 : vector<8x16xi32>
    %c16_i32_16 = arith.constant 16 : i32
    %29 = vector.broadcast %c16_i32_16 : i32 to vector<8x16xi32>
    %30 = arith.cmpi slt, %26, %29 : vector<8x16xi32>
    %31 = arith.andi %28, %30 : vector<8x16xi1>
    %c0_i32_17 = arith.constant 0 : i32
    %32 = arith.sitofp %c0_i32_17 : i32 to f32
    %33 = vector.broadcast %32 : f32 to vector<8x16xf32>
    %34 = arith.select %31, %22, %33 : vector<8x16xi1>, vector<8x16xf32>
    %c24 = arith.constant 24 : index
    %c0_18 = arith.constant 0 : index
    %35 = vector.load %arg6[%c24, %c0_18] : memref<32x128xf32, #tpu.memory_space<vmem>>, vector<8x16xf32>
    tpu.vector_store %arg6[%c24, %c0_18], %34 {strides = array<i32>} : memref<32x128xf32, #tpu.memory_space<vmem>>, vector<8x16xf32>,
    %c7 = arith.constant 7 : index
    %c0_19 = arith.constant 0 : index
    %36 = vector.load %arg6[%c7, %c0_19] : memref<32x128xf32, #tpu.memory_space<vmem>>, vector<16x128xf32>
    %c8_20 = arith.constant 8 : index
    %c0_21 = arith.constant 0 : index
    %37 = vector.load %arg6[%c8_20, %c0_21] : memref<32x128xf32, #tpu.memory_space<vmem>>, vector<16x128xf32>
    %c9 = arith.constant 9 : index
    %c0_22 = arith.constant 0 : index
    %38 = vector.load %arg6[%c9, %c0_22] : memref<32x128xf32, #tpu.memory_space<vmem>>, vector<16x128xf32>
    %39 = arith.minimumf %36, %37 : vector<16x128xf32>
    %40 = arith.maximumf %36, %37 : vector<16x128xf32>
    %41 = arith.minimumf %40, %38 : vector<16x128xf32>
    %42 = arith.maximumf %40, %38 : vector<16x128xf32>
    %43 = arith.minimumf %39, %41 : vector<16x128xf32>
    %44 = arith.maximumf %39, %41 : vector<16x128xf32>
    %c1_i32 = arith.constant 1 : i32
    %45 = tpu.dynamic_rotate %43 by %c1_i32 dim 1 : vector<16x128xf32>, i32 -> vector<16x128xf32>
    %46 = arith.maximumf %45, %43 : vector<16x128xf32>
    %c127_i32 = arith.constant 127 : i32
    %47 = tpu.dynamic_rotate %43 by %c127_i32 dim 1 : vector<16x128xf32>, i32 -> vector<16x128xf32>
    %48 = arith.maximumf %46, %47 : vector<16x128xf32>
    %c1_i32_23 = arith.constant 1 : i32
    %49 = tpu.dynamic_rotate %42 by %c1_i32_23 dim 1 : vector<16x128xf32>, i32 -> vector<16x128xf32>
    %50 = arith.minimumf %49, %42 : vector<16x128xf32>
    %c127_i32_24 = arith.constant 127 : i32
    %51 = tpu.dynamic_rotate %42 by %c127_i32_24 dim 1 : vector<16x128xf32>, i32 -> vector<16x128xf32>
    %52 = arith.minimumf %50, %51 : vector<16x128xf32>
    %c1_i32_25 = arith.constant 1 : i32
    %53 = tpu.dynamic_rotate %44 by %c1_i32_25 dim 1 : vector<16x128xf32>, i32 -> vector<16x128xf32>
    %c127_i32_26 = arith.constant 127 : i32
    %54 = tpu.dynamic_rotate %44 by %c127_i32_26 dim 1 : vector<16x128xf32>, i32 -> vector<16x128xf32>
    %55 = arith.minimumf %53, %44 : vector<16x128xf32>
    %56 = arith.maximumf %53, %44 : vector<16x128xf32>
    %57 = arith.minimumf %56, %54 : vector<16x128xf32>
    %58 = arith.maximumf %55, %57 : vector<16x128xf32>
    %59 = arith.minimumf %48, %58 : vector<16x128xf32>
    %60 = arith.maximumf %48, %58 : vector<16x128xf32>
    %61 = arith.minimumf %60, %52 : vector<16x128xf32>
    %62 = arith.maximumf %59, %61 : vector<16x128xf32>
    %63 = vector.extract_strided_slice %62 {offsets = [0, 0], sizes = [16, 16], strides = [1, 1]} : vector<16x128xf32> to vector<16x16xf32>
    %c0_27 = arith.constant 0 : index
    %c0_28 = arith.constant 0 : index
    %c0_29 = arith.constant 0 : index
    %64 = vector.load %arg5[%c0_27, %c0_28, %c0_29] : memref<1x16x16xf32, #tpu.memory_space<vmem>>, vector<1x16x16xf32>
    %65 = vector.shape_cast %64 : vector<1x16x16xf32> to vector<16x16xf32>
    %66 = vector.shape_cast %63 : vector<16x16xf32> to vector<1x16x16xf32>
    tpu.vector_store %arg5[%c0_27, %c0_28, %c0_29], %66 {strides = array<i32>} : memref<1x16x16xf32, #tpu.memory_space<vmem>>, vector<1x16x16xf32>,
    return
  }
  func.func @transform_0(%arg0: i32, %arg1: i32) -> (i32, i32, i32) {
    %c2_i32 = arith.constant 2 : i32
    %0 = arith.muli %arg1, %c2_i32 : i32
    %c1_i32 = arith.constant 1 : i32
    %1 = arith.subi %0, %c1_i32 : i32
    %c0_i32 = arith.constant 0 : i32
    %2 = arith.maxsi %1, %c0_i32 : i32
    %c0_i32_0 = arith.constant 0 : i32
    %c0_i32_1 = arith.constant 0 : i32
    return %arg0, %2, %c0_i32_0 : i32, i32, i32
  }
  func.func @transform_1(%arg0: i32, %arg1: i32) -> (i32, i32, i32) {
    %c0_i32 = arith.constant 0 : i32
    %c0_i32_0 = arith.constant 0 : i32
    return %arg0, %arg1, %c0_i32 : i32, i32, i32
  }
  func.func @transform_2(%arg0: i32, %arg1: i32) -> (i32, i32, i32) {
    %c1_i32 = arith.constant 1 : i32
    %0 = arith.addi %arg1, %c1_i32 : i32
    %c2_i32 = arith.constant 2 : i32
    %1 = arith.muli %0, %c2_i32 : i32
    %c1_i32_0 = arith.constant 1 : i32
    %2 = arith.minsi %1, %c1_i32_0 : i32
    %c0_i32 = arith.constant 0 : i32
    %c0_i32_1 = arith.constant 0 : i32
    return %arg0, %2, %c0_i32 : i32, i32, i32
  }
  func.func @transform_3(%arg0: i32, %arg1: i32) -> (i32, i32, i32) {
    %c0_i32 = arith.constant 0 : i32
    %c0_i32_0 = arith.constant 0 : i32
    return %arg0, %arg1, %c0_i32 : i32, i32, i32
  }
}

</mosaic_0001>

<llo_original>
// kernel: tpu_custom_call.1
$region0: #{tpu_custom_call.1}
  #allocation0 [shape = 'u32[]', space=smem, size = 0x4, offset = 0x4, fixed_abs, tag = 'smem constant byte address 0x4 - core index']
  #allocation1 [shape = 'u32[144,128]{1,0:T(1,128)}', space=vmem, size = 0x12000, scoped, tag = 'internal scratch']
  #allocation2 [shape = 'f32[32,128]{1,0:T(8,128)}', space=vmem, size = 0x4000, scoped, tag = 'scratch operand']
  %s0 = inlined_call_operand.hbm [shape: f32[2,16,16], index: 0, kind: input, shape index: {}]
  %s1 = inlined_call_operand.hbm [shape: f32[2,16,16], index: 1, kind: input, shape index: {}]
  %s2 = inlined_call_operand.hbm [shape: f32[2,16,16], index: 2, kind: input, shape index: {}]
  %s3 = inlined_call_operand.hbm [shape: f32[2,16,16], index: 3, kind: output, shape index: {}]
  %s4 = sld [smem:[#allocation0]]
  $region57: #{tpu_custom_call.1} parent=0
    _
  %s6 = ssub.s32 1, %s4
  %s7 = scalar_select 0, %s6, %s4
  $region1: #{tpu_custom_call.1} parent=0
    #allocation3 [shape = 'u8[8192]{0}', space=vmem, size = 0x2000, scoped, tag = 'input window, operand 0']
    #allocation4 [shape = 's32[2]{0}', space=sflag, size = 0x8, scoped, tag = 'scoped memory for tpu_custom_call.1']
    #allocation5 [shape = 's32[2]{0}', space=sflag, size = 0x8, scoped, tag = 'scoped memory for tpu_custom_call.1']
    #allocation6 [shape = 'u8[16384]{0}', space=vmem, size = 0x4000, scoped, tag = 'input window, operand 1']
    #allocation7 [shape = 's32[2]{0}', space=sflag, size = 0x8, scoped, tag = 'scoped memory for tpu_custom_call.1']
    #allocation8 [shape = 'u8[8192]{0}', space=vmem, size = 0x2000, scoped, tag = 'input window, operand 2']
    #allocation9 [shape = 'u8[16384]{0}', space=vmem, size = 0x4000, scoped, tag = 'output window, operand 0']
    %8 = vsyncpa [#allocation4], 0
    %s9 = scalar_lea.sflag [#allocation4], 1
    %10 = vsyncpa %s9, 0
    %11 = vsyncpa [#allocation7], 0
    %s12 = scalar_lea.sflag [#allocation7], 1
    %13 = vsyncpa %s12, 0
    %14 = vsyncpa [#allocation5], 0
    %s15 = scalar_lea.sflag [#allocation5], 1
    %16 = vsyncpa %s15, 0
    loop: start=0, step=1, limit=4
    $region2: #{tpu_custom_call.1} parent=1 // loop_pre_header
      _
    $region3: #{tpu_custom_call.1} parent=1 // loop_header
      %s18 = sphi 0, %s22
      %p19 = scmp.ge.s32.totalorder %s18, 4
      %s25 = sphi 0, %s37
      %s26 = sphi 0, %s33
      %s27 = sphi 0, %s25
      %s28 = sphi 0, %s26
      %s29 = sphi 0, %s27
      %s30 = sphi 0, %s28
      %s50 = sphi 0, %s52
      %s53 = sphi 0, %s50
      %s54 = sphi 0, %s53
      %s70 = sphi 0, %s54
      %s78 = sphi 0, %s80
      %s81 = sphi 0, %s78
      %s82 = sphi 0, %s81
      %s98 = sphi 0, %s82
      %s114 = sphi 0, %s116
      %s117 = sphi 0, %s114
      %s118 = sphi 0, %s117
      %s134 = sphi 0, %s118
      %s142 = sphi 0, %s144
      %s145 = sphi 0, %s142
      %s146 = sphi 0, %s145
      %s162 = sphi 0, %s146
    $region4: #{tpu_custom_call.1} parent=1 // loop_header_branch
      %21 = sbr.rel (%p19) target = $region8
    $region5: #{tpu_custom_call.1} parent=1 // loop_body
      %s23 = ssub.s32 %s18, 1
      %s24 = ssub.s32 %s18, 2
      %s31 = sadd.s32 1, %s26
      %p32 = scmp.ge.s32.totalorder %s31, 1
      %s33 = scalar_select %p32, 0, %s31
      %s34 = sadd.s32 1, %s25
      %s35 = scalar_select %p32, %s34, %s25
      %p36 = scmp.ge.s32.totalorder %s35, 2
      %s37 = scalar_select %p36, 0, %s35
      %s38 = smul.u32 %s26, 2
      %s39 = ssub.s32 %s38, 1
      %p40 = scmp.gt.s32.totalorder %s39, 0
      %s41 = scalar_select %p40, %s39, 0
      %s42 = smul.u32 %s33, 2
      %s43 = ssub.s32 %s42, 1
      %p44 = scmp.gt.s32.totalorder %s43, 0
      %s45 = scalar_select %p44, %s43, 0
      %s46 = ssub.s32 %s25, %s37
      %s47 = ssub.s32 %s41, %s45
      %s48 = sor.u32 %s46, %s47
      %p49 = scmp.eq.s32.totalorder %s48, 0
      %s51 = sadd.s32 %s50, 1
      %s52 = scalar_select %p49, %s50, %s51
      %p55 = pneg %p49
      %p56 = scmp.eq.s32.totalorder %s18, 1
      %p57 = por %p55, %p56
      %p58 = scmp.ne.s32.totalorder %s50, %s53
      %p59 = scmp.eq.s32.totalorder %s18, 0
      %p60 = por %p58, %p59
      %p61 = scmp.ne.s32.totalorder %s50, %s53
      %p62 = scmp.eq.s32.totalorder %s23, 1
      %p63 = por %p61, %p62
      %p64 = scmp.ne.s32.totalorder %s53, %s54
      %p65 = scmp.eq.s32.totalorder %s23, 0
      %p66 = por %p64, %p65
      %p67 = scmp.ne.s32.totalorder %s53, %s54
      %p68 = scmp.eq.s32.totalorder %s24, 1
      %p69 = por %p67, %p68
      %p71 = scmp.ne.s32.totalorder %s54, %s70
      %p72 = scmp.eq.s32.totalorder %s24, 0
      %p73 = por %p71, %p72
      %s74 = ssub.s32 %s25, %s37
      %s75 = ssub.s32 %s26, %s33
      %s76 = sor.u32 %s74, %s75
      %p77 = scmp.eq.s32.totalorder %s76, 0
      %s79 = sadd.s32 %s78, 1
      %s80 = scalar_select %p77, %s78, %s79
      %p83 = pneg %p77
      %p84 = scmp.eq.s32.totalorder %s18, 1
      %p85 = por %p83, %p84
      %p86 = scmp.ne.s32.totalorder %s78, %s81
      %p87 = scmp.eq.s32.totalorder %s18, 0
      %p88 = por %p86, %p87
      %p89 = scmp.ne.s32.totalorder %s78, %s81
      %p90 = scmp.eq.s32.totalorder %s23, 1
      %p91 = por %p89, %p90
      %p92 = scmp.ne.s32.totalorder %s81, %s82
      %p93 = scmp.eq.s32.totalorder %s23, 0
      %p94 = por %p92, %p93
      %p95 = scmp.ne.s32.totalorder %s81, %s82
      %p96 = scmp.eq.s32.totalorder %s24, 1
      %p97 = por %p95, %p96
      %p99 = scmp.ne.s32.totalorder %s82, %s98
      %p100 = scmp.eq.s32.totalorder %s24, 0
      %p101 = por %p99, %p100
      %s102 = sadd.s32 %s26, 1
      %s103 = smul.u32 %s102, 2
      %p104 = scmp.lt.s32.totalorder %s103, 1
      %s105 = scalar_select %p104, %s103, 1
      %s106 = sadd.s32 %s33, 1
      %s107 = smul.u32 %s106, 2
      %p108 = scmp.lt.s32.totalorder %s107, 1
      %s109 = scalar_select %p108, %s107, 1
      %s110 = ssub.s32 %s25, %s37
      %s111 = ssub.s32 %s105, %s109
      %s112 = sor.u32 %s110, %s111
      %p113 = scmp.eq.s32.totalorder %s112, 0
      %s115 = sadd.s32 %s114, 1
      %s116 = scalar_select %p113, %s114, %s115
      %p119 = pneg %p113
      %p120 = scmp.eq.s32.totalorder %s18, 1
      %p121 = por %p119, %p120
      %p122 = scmp.ne.s32.totalorder %s114, %s117
      %p123 = scmp.eq.s32.totalorder %s18, 0
      %p124 = por %p122, %p123
      %p125 = scmp.ne.s32.totalorder %s114, %s117
      %p126 = scmp.eq.s32.totalorder %s23, 1
      %p127 = por %p125, %p126
      %p128 = scmp.ne.s32.totalorder %s117, %s118
      %p129 = scmp.eq.s32.totalorder %s23, 0
      %p130 = por %p128, %p129
      %p131 = scmp.ne.s32.totalorder %s117, %s118
      %p132 = scmp.eq.s32.totalorder %s24, 1
      %p133 = por %p131, %p132
      %p135 = scmp.ne.s32.totalorder %s118, %s134
      %p136 = scmp.eq.s32.totalorder %s24, 0
      %p137 = por %p135, %p136
      %s138 = ssub.s32 %s25, %s37
      %s139 = ssub.s32 %s26, %s33
      %s140 = sor.u32 %s138, %s139
      %p141 = scmp.eq.s32.totalorder %s140, 0
      %s143 = sadd.s32 %s142, 1
      %s144 = scalar_select %p141, %s142, %s143
      %p147 = pneg %p141
      %p148 = scmp.eq.s32.totalorder %s18, 1
      %p149 = por %p147, %p148
      %p150 = scmp.ne.s32.totalorder %s142, %s145
      %p151 = scmp.eq.s32.totalorder %s18, 0
      %p152 = por %p150, %p151
      %p153 = scmp.ne.s32.totalorder %s142, %s145
      %p154 = scmp.eq.s32.totalorder %s23, 1
      %p155 = por %p153, %p154
      %p156 = scmp.ne.s32.totalorder %s145, %s146
      %p157 = scmp.eq.s32.totalorder %s23, 0
      %p158 = por %p156, %p157
      %p159 = scmp.ne.s32.totalorder %s145, %s146
      %p160 = scmp.eq.s32.totalorder %s24, 1
      %p161 = por %p159, %p160
      %p163 = scmp.ne.s32.totalorder %s146, %s162
      %p164 = scmp.eq.s32.totalorder %s24, 0
      %p165 = por %p163, %p164
      %p166 = scmp.le.s32.totalorder 1, %s18
      %p167 = scmp.lt.s32.totalorder %s18, 3
      %p168 = pnand %p166, %p167
      %p169 = pneg %p168
      // Predicated region
      $region9: #{tpu_custom_call.1} parent=5 // pred_check
        _
      $region10: #{tpu_custom_call.1} parent=5 // pred_check_branch
        %171 = sbr.rel (%p168) target = $region12
      $region11: #{tpu_custom_call.1} parent=5 // pred_region
        %s172 = ssub.s32 %s18, 1
      $region12: #{tpu_custom_call.1} parent=5 // pred_fallthru
        _
      %p173 = scmp.lt.s32.totalorder %s18, 2
      // Predicated region
      $region13: #{tpu_custom_call.1} parent=5 // pred_check
        %p174 = pneg %p173
      $region14: #{tpu_custom_call.1} parent=5 // pred_check_branch
        %176 = sbr.rel (%p174) target = $region16
      $region15: #{tpu_custom_call.1} parent=5 // pred_region
        // Predicated region
        $region17: #{tpu_custom_call.1} parent=15 // pred_check
          %p177 = pneg %p60
        $region18: #{tpu_custom_call.1} parent=15 // pred_check_branch
          %179 = sbr.rel (%p177) target = $region20
        $region19: #{tpu_custom_call.1} parent=15 // pred_region
          %s180 = sand.u32 %s50, 1
          %s181 = scalar_lea.sflag [#allocation4], %s180
          %s182 = sand.u32 %s50, 1
          %s183 = smul.addr %s182, 8
          %s184 = scalar_lea.vmem [#allocation3], %s183
          %s185 = smul.u32 %s26, 2
          %s186 = ssub.s32 %s185, 1
          %p187 = scmp.gt.s32.totalorder %s186, 0
          %s188 = scalar_select %p187, %s186, 0
          %s190 = ssub.s32 128, 128
          %191 = vsyncadd %s181, %s190
          %s192 = smul.addr %s25, 2
          %s193 = sadd.s32 %s188, %s192
          %s194 = smul.addr %s193, 128
          %s195 = scalar_lea.hbm %s0, %s194
          %s197 = sshll.u32 %s184, 4
          %s198 = int_to_ptr.vmem [resolvable:$true] %s197
          %200 = dma.hbm_to_vmem [thread:$0]  %s195, 128, %s198, %s181
        $region20: #{tpu_custom_call.1} parent=15 // pred_fallthru
          _
        // Predicated region
        $region21: #{tpu_custom_call.1} parent=15 // pred_check
          %p201 = pneg %p88
        $region22: #{tpu_custom_call.1} parent=15 // pred_check_branch
          %203 = sbr.rel (%p201) target = $region24
        $region23: #{tpu_custom_call.1} parent=15 // pred_region
          %s204 = sand.u32 %s18, 1
          %s205 = scalar_lea.sflag [#allocation7], %s204
          %s206 = sand.u32 %s78, 1
          %s207 = smul.addr %s206, 16
          %s208 = scalar_lea.vmem [#allocation6], %s207
          %s209 = smul.u32 2, %s26
          %s211 = ssub.s32 256, 256
          %212 = vsyncadd %s205, %s211
          %s213 = smul.addr %s25, 2
          %s214 = sadd.s32 %s209, %s213
          %s215 = smul.addr %s214, 128
          %s216 = scalar_lea.hbm %s1, %s215
          %s217 = sshll.u32 %s208, 4
          %s218 = int_to_ptr.vmem [resolvable:$true] %s217
          %223 = dma.hbm_to_vmem [thread:$0]  %s216, 256, %s218, %s205, 128, 128, 8
        $region24: #{tpu_custom_call.1} parent=15 // pred_fallthru
          _
        // Predicated region
        $region25: #{tpu_custom_call.1} parent=15 // pred_check
          %p224 = pneg %p124
        $region26: #{tpu_custom_call.1} parent=15 // pred_check_branch
          %226 = sbr.rel (%p224) target = $region28
        $region27: #{tpu_custom_call.1} parent=15 // pred_region
          %s227 = sand.u32 %s18, 1
          %s228 = scalar_lea.sflag [#allocation7], %s227
          %s229 = sand.u32 %s114, 1
          %s230 = smul.addr %s229, 8
          %s231 = scalar_lea.vmem [#allocation8], %s230
          %s232 = sadd.s32 %s26, 1
          %s233 = smul.u32 %s232, 2
          %p234 = scmp.lt.s32.totalorder %s233, 1
          %s235 = scalar_select %p234, %s233, 1
          %s237 = ssub.s32 128, 128
          %238 = vsyncadd %s228, %s237
          %s239 = smul.addr %s25, 2
          %s240 = sadd.s32 %s235, %s239
          %s241 = smul.addr %s240, 128
          %s242 = scalar_lea.hbm %s2, %s241
          %s244 = sshll.u32 %s231, 4
          %s245 = int_to_ptr.vmem [resolvable:$true] %s244
          %247 = dma.hbm_to_vmem [thread:$0]  %s242, 128, %s245, %s228
        $region28: #{tpu_custom_call.1} parent=15 // pred_fallthru
          _
      $region16: #{tpu_custom_call.1} parent=5 // pred_fallthru
        _
      %p248 = scmp.le.s32.totalorder 1, %s18
      %p249 = scmp.lt.s32.totalorder %s18, 3
      %p250 = pnand %p248, %p249
      %p251 = pneg %p250
      // Predicated region
      $region29: #{tpu_custom_call.1} parent=5 // pred_check
        _
      $region30: #{tpu_custom_call.1} parent=5 // pred_check_branch
        %253 = sbr.rel (%p250) target = $region32
      $region31: #{tpu_custom_call.1} parent=5 // pred_region
        %s254 = ssub.s32 %s18, 1
        %s255 = sand.u32 %s53, 1
        %s256 = scalar_lea.sflag [#allocation4], %s255
        %s257 = sand.u32 %s53, 1
        %s258 = smul.addr %s257, 8
        %s259 = scalar_lea.vmem [#allocation3], %s258
        // Predicated region
        $region33: #{tpu_custom_call.1} parent=31 // pred_check
          %p260 = pneg %p66
        $region34: #{tpu_custom_call.1} parent=31 // pred_check_branch
          %262 = sbr.rel (%p260) target = $region36
        $region35: #{tpu_custom_call.1} parent=31 // pred_region
          %263 = dma.done %s256, 128
        $region36: #{tpu_custom_call.1} parent=31 // pred_fallthru
          _
        %s264 = sand.u32 %s23, 1
        %s265 = scalar_lea.sflag [#allocation7], %s264
        %s266 = sand.u32 %s81, 1
        %s267 = smul.addr %s266, 16
        %s268 = scalar_lea.vmem [#allocation6], %s267
        // Predicated region
        $region37: #{tpu_custom_call.1} parent=31 // pred_check
          %p269 = pneg %p94
        $region38: #{tpu_custom_call.1} parent=31 // pred_check_branch
          %271 = sbr.rel (%p269) target = $region40
        $region39: #{tpu_custom_call.1} parent=31 // pred_region
          %272 = dma.done %s265, 256
        $region40: #{tpu_custom_call.1} parent=31 // pred_fallthru
          _
        %s273 = sand.u32 %s23, 1
        %s274 = scalar_lea.sflag [#allocation7], %s273
        %s275 = sand.u32 %s117, 1
        %s276 = smul.addr %s275, 8
        %s277 = scalar_lea.vmem [#allocation8], %s276
        // Predicated region
        $region41: #{tpu_custom_call.1} parent=31 // pred_check
          %p278 = pneg %p130
        $region42: #{tpu_custom_call.1} parent=31 // pred_check_branch
          %280 = sbr.rel (%p278) target = $region44
        $region43: #{tpu_custom_call.1} parent=31 // pred_region
          %281 = dma.done %s274, 128
        $region44: #{tpu_custom_call.1} parent=31 // pred_fallthru
          _
        %s282 = sand.u32 %s53, 1
        %s283 = scalar_lea.sflag [#allocation4], %s282
        %s284 = sand.u32 %s53, 1
        %s285 = smul.addr %s284, 8
        %s286 = scalar_lea.vmem [#allocation3], %s285
        %p287 = pneg %p66
        %p288 = pneg %p63
        %s289 = sand.u32 %s23, 1
        %s290 = scalar_lea.sflag [#allocation7], %s289
        %s291 = sand.u32 %s81, 1
        %s292 = smul.addr %s291, 16
        %s293 = scalar_lea.vmem [#allocation6], %s292
        %p294 = pneg %p94
        %p295 = pneg %p91
        %s296 = sand.u32 %s23, 1
        %s297 = scalar_lea.sflag [#allocation7], %s296
        %s298 = sand.u32 %s117, 1
        %s299 = smul.addr %s298, 8
        %s300 = scalar_lea.vmem [#allocation8], %s299
        %p301 = pneg %p130
        %p302 = pneg %p127
        %p303 = pneg %p158
        %p304 = pneg %p155
        %s305 = sand.u32 %s145, 1
        %s306 = scalar_lea.sflag [#allocation5], %s305
        %s307 = sand.u32 %s145, 1
        %s308 = smul.addr %s307, 16
        %s309 = scalar_lea.vmem [#allocation9], %s308
        %s310 = smul.u32 %s28, 2
        %s311 = ssub.s32 %s310, 1
        %p312 = scmp.gt.s32.totalorder %s311, 0
        %s313 = scalar_select %p312, %s311, 0
        %s314 = smul.u32 2, %s28
        %s315 = sadd.s32 %s28, 1
        %s316 = smul.u32 %s315, 2
        %p317 = scmp.lt.s32.totalorder %s316, 1
        %s318 = scalar_select %p317, %s316, 1
        %s319 = smul.u32 2, %s28
        %s320 = smul.u32 %s28, 16
        %vm321 = vcmask 1047680
        %322 = vst.msk [vmem:[#allocation2] sm:$0xff] %vm321, 0.0
        %323 = vst.msk [vmem:[#allocation2 + $0x8] sm:$0xff] %vm321, 0.0
        %324 = vst.msk [vmem:[#allocation2 + $0x10] sm:$0xff] %vm321, 0.0
        %325 = vst.msk [vmem:[#allocation2 + $0x18] sm:$0xff] %vm321, 0.0
        %v326 = vld [vmem:[%s259] sm:$0xff]
        %s327 = ssub.s32 %s320, 8
        %v328 = vlaneseq
        %v329 = vshrl.u32 %v328, 7
        %v330 = vstv %s327
        %v331 = vadd.s32 %v330, %v329
        %vm332 = vcmp.ge.s32.totalorder %v331, 0
        %vm333 = vcmp.lt.s32.totalorder %v331, 16
        %vm334 = vmand %vm332, %vm333
        %v335 = vsel %vm334, %v326, 0.0
        %vm336 = vcmask 130048
        %337 = vst.msk [vmem:[#allocation2] sm:$0xff] %vm336, %v335
        %v338 = vld [vmem:[%s268] sm:$0xff]
        %v339 = vld [vmem:[%s268 + $0x8] sm:$0xff]
        %340 = vst.msk [vmem:[#allocation2 + $0x8] sm:$0xff] %vm336, %v338
        %341 = vst.msk [vmem:[#allocation2 + $0x10] sm:$0xff] %vm336, %v339
        %v342 = vld [vmem:[%s277] sm:$0xff]
        %s343 = sadd.s32 %s320, 16
        %v344 = vstv %s343
        %v345 = vadd.s32 %v344, %v329
        %vm346 = vcmp.ge.s32.totalorder %v345, 0
        %vm347 = vcmp.lt.s32.totalorder %v345, 16
        %vm348 = vmand %vm346, %vm347
        %v349 = vsel %vm348, %v342, 0.0
        %350 = vst.msk [vmem:[#allocation2 + $0x18] sm:$0xff] %vm336, %v349
        %v351 = vld [vmem:[#allocation2 + $0x7] sm:$0xff]
        %v352 = vld [vmem:[#allocation2 + $0xf] sm:$0xff]
        %v353 = vld [vmem:[#allocation2 + $0x8] sm:$0xff]
        %v354 = vld [vmem:[#allocation2 + $0x10] sm:$0xff]
        %v355 = vld [vmem:[#allocation2 + $0x9] sm:$0xff]
        %v356 = vld [vmem:[#allocation2 + $0x11] sm:$0xff]
        %v357 = vmin.f32 %v351, %v353
        %v358 = vmin.f32 %v352, %v354
        %v359 = vmax.f32 %v351, %v353
        %v360 = vmax.f32 %v352, %v354
        %v361 = vmin.f32 %v359, %v355
        %v362 = vmin.f32 %v360, %v356
        %v363 = vmax.f32 %v359, %v355
        %v364 = vmax.f32 %v360, %v356
        %v365 = vmin.f32 %v357, %v361
        %v366 = vmin.f32 %v358, %v362
        %v367 = vmax.f32 %v357, %v361
        %v368 = vmax.f32 %v358, %v362
        %369 = vrot.lane.b32.xlu0 %v365, 1
        %v370 = vpop.permute.xlu0 %369
        %371 = vrot.lane.b32.xlu0 %v366, 1
        %v372 = vpop.permute.xlu0 %371
        %v373 = vmax.f32 %v370, %v365
        %v374 = vmax.f32 %v372, %v366
        %375 = vrot.lane.b32.xlu0 %v365, 127
        %v376 = vpop.permute.xlu0 %375
        %377 = vrot.lane.b32.xlu0 %v366, 127
        %v378 = vpop.permute.xlu0 %377
        %v379 = vmax.f32 %v373, %v376
        %v380 = vmax.f32 %v374, %v378
        %381 = vrot.lane.b32.xlu0 %v363, 1
        %v382 = vpop.permute.xlu0 %381
        %383 = vrot.lane.b32.xlu0 %v364, 1
        %v384 = vpop.permute.xlu0 %383
        %v385 = vmin.f32 %v382, %v363
        %v386 = vmin.f32 %v384, %v364
        %387 = vrot.lane.b32.xlu0 %v363, 127
        %v388 = vpop.permute.xlu0 %387
        %389 = vrot.lane.b32.xlu0 %v364, 127
        %v390 = vpop.permute.xlu0 %389
        %v391 = vmin.f32 %v385, %v388
        %v392 = vmin.f32 %v386, %v390
        %393 = vrot.lane.b32.xlu0 %v367, 1
        %v394 = vpop.permute.xlu0 %393
        %395 = vrot.lane.b32.xlu0 %v368, 1
        %v396 = vpop.permute.xlu0 %395
        %397 = vrot.lane.b32.xlu0 %v367, 127
        %v398 = vpop.permute.xlu0 %397
        %399 = vrot.lane.b32.xlu0 %v368, 127
        %v400 = vpop.permute.xlu0 %399
        %v401 = vmin.f32 %v394, %v367
        %v402 = vmin.f32 %v396, %v368
        %v403 = vmax.f32 %v394, %v367
        %v404 = vmax.f32 %v396, %v368
        %v405 = vmin.f32 %v403, %v398
        %v406 = vmin.f32 %v404, %v400
        %v407 = vmax.f32 %v401, %v405
        %v408 = vmax.f32 %v402, %v406
        %v409 = vmin.f32 %v379, %v407
        %v410 = vmin.f32 %v380, %v408
        %v411 = vmax.f32 %v379, %v407
        %v412 = vmax.f32 %v380, %v408
        %v413 = vmin.f32 %v411, %v391
        %v414 = vmin.f32 %v412, %v392
        %v415 = vmax.f32 %v409, %v413
        %v416 = vmax.f32 %v410, %v414
        %417 = vst.msk [vmem:[%s309] sm:$0xff] %vm336, %v415
        %418 = vst.msk [vmem:[%s309 + $0x8] sm:$0xff] %vm336, %v416
        %s419 = sand.u32 %s145, 1
        %s420 = scalar_lea.sflag [#allocation5], %s419
        %s421 = sand.u32 %s145, 1
        %s422 = smul.addr %s421, 16
        %s423 = scalar_lea.vmem [#allocation9], %s422
        // Predicated region
        $region45: #{tpu_custom_call.1} parent=31 // pred_check
          %p424 = pneg %p155
        $region46: #{tpu_custom_call.1} parent=31 // pred_check_branch
          %426 = sbr.rel (%p424) target = $region48
        $region47: #{tpu_custom_call.1} parent=31 // pred_region
          %s427 = smul.u32 2, %s28
          %s429 = ssub.s32 256, 256
          %430 = vsyncadd %s420, %s429
          %s431 = smul.addr %s27, 2
          %s432 = sadd.s32 %s427, %s431
          %s433 = smul.addr %s432, 128
          %s434 = scalar_lea.hbm %s3, %s433
          %s435 = sshll.u32 %s423, 4
          %s436 = int_to_ptr.vmem [resolvable:$true] %s435
          %441 = dma.vmem_to_hbm [thread:$0]  %s436, 256, %s434, %s420, 128, 128, 8
        $region48: #{tpu_custom_call.1} parent=31 // pred_fallthru
          _
      $region32: #{tpu_custom_call.1} parent=5 // pred_fallthru
        _
      %p442 = scmp.le.s32.totalorder 2, %s18
      // Predicated region
      $region49: #{tpu_custom_call.1} parent=5 // pred_check
        %p443 = pneg %p442
      $region50: #{tpu_custom_call.1} parent=5 // pred_check_branch
        %445 = sbr.rel (%p443) target = $region52
      $region51: #{tpu_custom_call.1} parent=5 // pred_region
        %s446 = ssub.s32 %s18, 2
        // Predicated region
        $region53: #{tpu_custom_call.1} parent=51 // pred_check
          %p447 = pneg %p161
        $region54: #{tpu_custom_call.1} parent=51 // pred_check_branch
          %449 = sbr.rel (%p447) target = $region56
        $region55: #{tpu_custom_call.1} parent=51 // pred_region
          %s450 = sand.u32 %s146, 1
          %s451 = scalar_lea.sflag [#allocation5], %s450
          %s452 = sand.u32 %s146, 1
          %s453 = smul.addr %s452, 16
          %s454 = scalar_lea.vmem [#allocation9], %s453
          %455 = dma.done %s451, 256
        $region56: #{tpu_custom_call.1} parent=51 // pred_fallthru
          _
      $region52: #{tpu_custom_call.1} parent=5 // pred_fallthru
        _
    $region6: #{tpu_custom_call.1} parent=1 // loop_footer
      %s22 = sadd.s32 1, %s18
    $region7: #{tpu_custom_call.1} parent=1 // loop_footer_branch
      %17 = sbr.rel target = $region3
    $region8: #{tpu_custom_call.1} parent=1 // loop_exit
      _
    %456 = vsyncpa [#allocation4], 1
    %s457 = scalar_lea.sflag [#allocation4], 1
    %458 = vsyncpa %s457, 1
    %459 = vsyncpa [#allocation7], 1
    %s460 = scalar_lea.sflag [#allocation7], 1
    %461 = vsyncpa %s460, 1
    %462 = vsyncpa [#allocation5], 1
    %s463 = scalar_lea.sflag [#allocation5], 1
    %464 = vsyncpa %s463, 1

</llo_original>
